<compile_context>
chip_gen: v5e
topology: v5e:2x2
jax: 0.10.0
libtpu: 0.0.40
codegen_flags: <defaults>
</compile_context>

<pallas_src>
import numpy as np
import jax
import jax.numpy as jnp
from jax import lax
from jax.experimental import pallas as pl
from jax.experimental.pallas import tpu as pltpu

# ----------------------------- problem sizes ------------------------------ #
B, C, H, W = 2, 3, 16, 16        # small stand-in for 1x3x112x112 face crops
D = 32                           # feature dim per "model"
M = 2                            # ensemble size (len(model_names))
K_IN = C * H * W                 # 768   (= 6 * 128 lanes, lane-dense)
HW = H * W                       # 256   (= 2 * 128 lanes, lane-dense)
LANE = 128                       # per-model lane block (pad D=32 -> 128)
MDP = M * LANE                   # 256   padded stacked feature width

ALPHA = 1.25 / 128.0             # attack step size
MU = 1.0                         # momentum coefficient (mi)
DELTA_CLIP = 20.4 / 128.0        # per-pixel perturbation budget
IMG_CLIP = 127.5 / 128.0         # valid image range
EPS = 1e-8                       # torch.cosine_similarity eps (per-norm clamp)
NORM_EPS = 1e-12                 # guards grad / ||grad|| against zero gradient
MAX_STEP = 3
TS = 10.0                        # loss threshold ("break" predicate)
WEIGHTS = [1.0 / M] * M          # weights=None branch -> compile-time constants


# ------------------- Gaussian blur as a band-matrix matmul ----------------- #
def _gauss1d(kernlen=5, nsig=3):
    x = np.linspace(-nsig, nsig, kernlen)
    k1 = np.exp(-0.5 * x * x)
    return (k1 / k1.sum()).astype(np.float32)     # outer(g1,g1) == gkern()/sum


def _band(n, g1):
    kl = len(g1)
    r = kl // 2
    m = np.zeros((n, n), np.float32)
    for i in range(n):
        for t in range(kl):
            j = i - r + t
            if 0 <= j < n:
                m[i, j] = g1[t]
    return m


_G1 = _gauss1d(5, 3)
# zero-padded depthwise 5x5 Gaussian conv on one (H,W) channel:
#   out_flat = in_flat @ kron(B_H, B_W)^T     (exact, separable, MXU-friendly)
_BLUR_MAT = np.kron(_band(H, _G1), _band(W, _G1)).T.astype(np.float32)  # (HW,HW)


# ----------------------------- Pallas kernels ------------------------------ #
def _feature_kernel(x_ref, w_ref, o_ref):
    # one-time stacked ensemble feature extraction for the target image
    o_ref[...] = jnp.dot(x_ref[...].astype(jnp.bfloat16), w_ref[...],
                         preferred_element_type=jnp.float32)


def ensemble_features(x_flat, w_fwd_bf16):
    return pl.pallas_call(
        _feature_kernel,
        out_shape=jax.ShapeDtypeStruct((B, MDP), jnp.float32),
    )(x_flat, w_fwd_bf16)


def _attack_kernel(img0_ref, wf_ref, wb_ref, that_ref, blur_ref,   # inputs
                   img_ref, best_ref, last_ref, lossb_ref,         # outputs
                   lb_s, act_s):                                   # scratch
    step = pl.program_id(0)

    # ------- step 0: initialize the VMEM-resident state ------- #
    @pl.when(step == 0)
    def _init():
        img_ref[...] = img0_ref[...]        # img = img_cp
        best_ref[...] = img0_ref[...]       # img_best = img_cp
        last_ref[...] = jnp.zeros_like(last_ref)
        lb_s[...] = jnp.full_like(lb_s, -1.0)     # loss_best = -1
        act_s[...] = jnp.ones_like(act_s)         # not broken yet

    img = img_ref[...]                      # (B, K_IN) f32
    cp = img0_ref[...]

    # ------- forward: stacked ensemble features, one bf16 MXU matmul ------- #
    feats = jnp.dot(img.astype(jnp.bfloat16), wf_ref[...],
                    preferred_element_type=jnp.float32)      # (B, MDP)
    that = that_ref[...]                                     # pre-normalized targets

    # cosine epilogue (f32, per-model 128-lane blocks -> no masked slices)
    loss = jnp.zeros((B, 1), jnp.float32)
    g_blocks = []
    for m in range(M):                                       # M=2, unrolled
        lo = m * LANE
        f = feats[:, lo:lo + LANE]                           # (B, 128)
        t = that[:, lo:lo + LANE]
        s = jnp.sum(f * t, axis=-1, keepdims=True)
        nf2 = jnp.sum(f * f, axis=-1, keepdims=True)
        inv_nf = lax.rsqrt(jnp.maximum(nf2, EPS * EPS))      # EUP rsqrt
        cos = s * inv_nf
        loss = loss + WEIGHTS[m] * cos
        # analytic d/df of  w_m * <f, t_hat> / max(||f||, eps)
        g_blocks.append((WEIGHTS[m] * inv_nf) * (t - (cos * inv_nf) * f))
    g_feat = jnp.concatenate(g_blocks, axis=-1)              # (B, MDP)

    # ------- backward: ONE stacked matmul through W^T ------- #
    grad = jnp.dot(g_feat.astype(jnp.bfloat16), wb_ref[...],
                   preferred_element_type=jnp.float32)       # (B, K_IN)

    # ------- best tracking + break predicate (in-kernel, per image) ------- #
    act = act_s[...] > 0.5                                   # (B,1) still running
    lb = lb_s[...]
    improved = act & (loss > lb)
    new_lb = jnp.where(improved, loss, lb)
    lb_s[...] = new_lb
    best_ref[...] = jnp.where(improved, img, best_ref[...])
    lossb_ref[...] = jnp.broadcast_to(new_lb, (B, LANE))     # lane-dense output
    do_update = act & (loss <= TS)                           # "break" gate

    # ------- TI: per-channel Gaussian blur matmul + spatial L2 normalize --- #
    bm = blur_ref[...]                                       # (HW, HW) resident
    gn_blocks = []
    for c in range(C):                                       # C=3, unrolled
        gc = grad[:, c * HW:(c + 1) * HW]                    # (B, 256)
        gbc = jnp.dot(gc, bm, preferred_element_type=jnp.float32)
        ss = jnp.sum(gbc * gbc, axis=-1, keepdims=True)      # per-(b,c) ||.||^2
        gn_blocks.append(gbc * lax.rsqrt(jnp.maximum(ss, NORM_EPS)))
    gn = jnp.concatenate(gn_blocks, axis=-1)                 # (B, K_IN)

    # ------- MI momentum + step + per-pixel clip ------- #
    last = last_ref[...]
    sign = MU * last + gn
    img_try = img + ALPHA * sign
    delta = jnp.clip(img_try - cp, -DELTA_CLIP, DELTA_CLIP)
    img_new = jnp.clip(cp + delta, -IMG_CLIP, IMG_CLIP)

    # conditional (per-image) in-place update of the resident state
    img_ref[...] = jnp.where(do_update, img_new, img)
    last_ref[...] = jnp.where(do_update, sign, last)
    act_s[...] = do_update.astype(jnp.float32)


def _run_attack(img0_flat, w_fwd_bf16, w_bwd_bf16, t_hat, blur_mat):
    const = lambda i: (0, 0)          # every array resident across all steps
    return pl.pallas_call(
        _attack_kernel,
        out_shape=(jax.ShapeDtypeStruct((B, K_IN), jnp.float32),   # final img
                   jax.ShapeDtypeStruct((B, K_IN), jnp.float32),   # img_best
                   jax.ShapeDtypeStruct((B, K_IN), jnp.float32),   # last_grad
                   jax.ShapeDtypeStruct((B, LANE), jnp.float32)),  # loss_best
        grid=(MAX_STEP,),
        in_specs=[pl.BlockSpec((B, K_IN), const),
                  pl.BlockSpec((K_IN, MDP), const),
                  pl.BlockSpec((MDP, K_IN), const),
                  pl.BlockSpec((B, MDP), const),
                  pl.BlockSpec((HW, HW), const)],
        out_specs=(pl.BlockSpec((B, K_IN), const),
                   pl.BlockSpec((B, K_IN), const),
                   pl.BlockSpec((B, K_IN), const),
                   pl.BlockSpec((B, LANE), const)),
        scratch_shapes=[pltpu.VMEM((B, 1), jnp.float32),    # loss_best state
                        pltpu.VMEM((B, 1), jnp.float32)],   # active mask
        compiler_params=pltpu.CompilerParams(
            dimension_semantics=("arbitrary",)),
    )(img0_flat, w_fwd_bf16, w_bwd_bf16, t_hat, blur_mat)


run_attack = jax.jit(_run_attack)


# ---------------------------------- main ----------------------------------- #
if __name__ == "__main__":
    key = jax.random.PRNGKey(0)
    k1, k2, k3 = jax.random.split(key, 3)

    img = jax.random.uniform(k1, (B, C, H, W), jnp.float32,
                             minval=-IMG_CLIP, maxval=IMG_CLIP)
    target_img = jax.random.uniform(k2, (B, C, H, W), jnp.float32,
                                    minval=-IMG_CLIP, maxval=IMG_CLIP)
    # TODO(synk): synthetic deterministic linear "backbones" stand in for the
    #             pretrained IR152/IRSE/iresnet checkpoints.
    model_ws = 0.05 * jax.random.normal(k3, (M, K_IN, D), jnp.float32)

    # Stack the ensemble with each model padded to its own 128-lane block so
    # the forward output / cosine epilogue / backward LHS are all lane-dense.
    w_fwd = jnp.zeros((K_IN, MDP), jnp.float32)
    for m in range(M):
        w_fwd = w_fwd.at[:, m * LANE:m * LANE + D].set(model_ws[m])
    w_fwd_bf16 = w_fwd.astype(jnp.bfloat16)
    w_bwd_bf16 = jnp.transpose(w_fwd).astype(jnp.bfloat16)

    # target features (self.model(target_img)): one Pallas ensemble matmul,
    # then pre-divide by max(||t||, eps) once (torch clamps each norm).
    t_feats = ensemble_features(target_img.reshape(B, K_IN), w_fwd_bf16)
    t3 = t_feats.reshape(B, M, LANE)
    t_norm = jnp.sqrt(jnp.sum(t3 * t3, axis=-1, keepdims=True))
    t_hat = (t3 / jnp.maximum(t_norm, EPS)).reshape(B, MDP)

    blur_mat = jnp.asarray(_BLUR_MAT)                    # (HW, HW) f32

    out_img, img_best, last_grad, loss_best = run_attack(
        img.reshape(B, K_IN), w_fwd_bf16, w_bwd_bf16, t_hat, blur_mat)
    jax.block_until_ready((out_img, img_best, last_grad, loss_best))
    print("KERNEL_OK")
</pallas_src>

<mosaic_0001>
module attributes {stable_mosaic.version = 11 : i64} {
  func.func @_feature_kernel(%arg0: memref<2x768xf32, #tpu.memory_space<vmem>>, %arg1: memref<768x256xbf16, #tpu.memory_space<vmem>>, %arg2: memref<2x256xf32, #tpu.memory_space<vmem>>) attributes {dimension_semantics = [], scalar_prefetch = 0 : i64, scratch_operands = 0 : i64, tpu.core_type = #tpu.core_type<tc>} {
    %c0 = arith.constant 0 : index
    %c0_0 = arith.constant 0 : index
    %0 = vector.load %arg0[%c0, %c0_0] : memref<2x768xf32, #tpu.memory_space<vmem>>, vector<2x768xf32>
    %1 = arith.truncf %0 : vector<2x768xf32> to vector<2x768xbf16>
    %c0_1 = arith.constant 0 : index
    %c0_2 = arith.constant 0 : index
    %2 = vector.load %arg1[%c0_1, %c0_2] : memref<768x256xbf16, #tpu.memory_space<vmem>>, vector<768x256xbf16>
    %cst = arith.constant dense<0.000000e+00> : vector<2x256xf32>
    %3 = tpu.matmul %1, %2, %cst {dimension_numbers = #tpu.dot_dimension_numbers<[1], [0], [0], [1], [0, 0, 1, 1], [], []>} : vector<2x768xbf16>, vector<768x256xbf16>, vector<2x256xf32> -> vector<2x256xf32>
    %c0_3 = arith.constant 0 : index
    %c0_4 = arith.constant 0 : index
    %4 = vector.load %arg2[%c0_3, %c0_4] : memref<2x256xf32, #tpu.memory_space<vmem>>, vector<2x256xf32>
    tpu.vector_store %arg2[%c0_3, %c0_4], %3 {strides = array<i32>} : memref<2x256xf32, #tpu.memory_space<vmem>>, vector<2x256xf32>,
    return
  }
}

</mosaic_0001>

<llo_original>
// kernel: tpu_custom_call.1
$region0: #{tpu_custom_call.1}
  #allocation0 [shape = 'u32[]', space=smem, size = 0x4, offset = 0x4, fixed_abs, tag = 'smem constant byte address 0x4 - core index']
  #allocation1 [shape = 'u32[72,128]{1,0:T(1,128)}', space=vmem, size = 0x9000, scoped, tag = 'internal scratch']
  %s0 = inlined_call_operand.hbm [shape: f32[2,768], index: 0, kind: input, shape index: {}]
  %s1 = inlined_call_operand.hbm [shape: bf16[768,256], index: 1, kind: input, shape index: {}]
  %s2 = inlined_call_operand.hbm [shape: f32[2,256], index: 2, kind: output, shape index: {}]
  %s3 = sld [smem:[#allocation0]]
  $region26: #{tpu_custom_call.1} parent=0
    _
  %s5 = ssub.s32 1, %s3
  %s6 = scalar_select 0, %s5, %s3
  $region1: #{tpu_custom_call.1} parent=0
    #allocation2 [shape = 'u8[6144]{0}', space=vmem, size = 0x1800, scoped, tag = 'input window, operand 0, single buffered']
    #allocation3 [shape = 's32[1]{0}', space=sflag, size = 0x4, scoped, tag = 'scoped memory for tpu_custom_call.1']
    #allocation4 [shape = 's32[1]{0}', space=sflag, size = 0x4, scoped, tag = 'scoped memory for tpu_custom_call.1']
    #allocation5 [shape = 'u8[393216]{0}', space=vmem, size = 0x60000, scoped, tag = 'input window, operand 1, single buffered']
    #allocation6 [shape = 's32[1]{0}', space=sflag, size = 0x4, scoped, tag = 'scoped memory for tpu_custom_call.1']
    #allocation7 [shape = 'u8[2048]{0}', space=vmem, size = 0x800, scoped, tag = 'output window, operand 0, single buffered']
    %7 = vsyncpa [#allocation3], 0
    %8 = vsyncpa [#allocation6], 0
    %9 = vsyncpa [#allocation4], 0
    // Predicated region
    $region2: #{tpu_custom_call.1} parent=1 // pred_check
      _
    $region3: #{tpu_custom_call.1} parent=1 // pred_check_branch
      %11 = sbr.rel (0) target = $region5
    $region4: #{tpu_custom_call.1} parent=1 // pred_region
      %13 = vsyncadd [#allocation3], 0
      %s15 = sshll.u32 %s0, 4
      %s16 = int_to_ptr.hbm [resolvable:$true] %s15
      %s17 = sshll.u32 [#allocation2], 4
      %s18 = int_to_ptr.vmem [resolvable:$true] %s17
      %20 = dma.hbm_to_vmem [thread:$0]  %s16, 192, %s18, [#allocation3]
    $region5: #{tpu_custom_call.1} parent=1 // pred_fallthru
      _
    // Predicated region
    $region6: #{tpu_custom_call.1} parent=1 // pred_check
      _
    $region7: #{tpu_custom_call.1} parent=1 // pred_check_branch
      %22 = sbr.rel (0) target = $region9
    $region8: #{tpu_custom_call.1} parent=1 // pred_region
      %24 = vsyncadd [#allocation6], 0
      %s25 = sshll.u32 %s1, 4
      %s26 = int_to_ptr.hbm [resolvable:$true] %s25
      %s27 = sshll.u32 [#allocation5], 4
      %s28 = int_to_ptr.vmem [resolvable:$true] %s27
      %33 = dma.hbm_to_vmem [thread:$0]  %s26, 12288, %s28, [#allocation6], 128, 128, 8
    $region9: #{tpu_custom_call.1} parent=1 // pred_fallthru
      _
    // Predicated region
    $region10: #{tpu_custom_call.1} parent=1 // pred_check
      _
    $region11: #{tpu_custom_call.1} parent=1 // pred_check_branch
      %35 = sbr.rel (0) target = $region13
    $region12: #{tpu_custom_call.1} parent=1 // pred_region
      %37 = dma.done [#allocation3], 192
    $region13: #{tpu_custom_call.1} parent=1 // pred_fallthru
      _
    // Predicated region
    $region14: #{tpu_custom_call.1} parent=1 // pred_check
      _
    $region15: #{tpu_custom_call.1} parent=1 // pred_check_branch
      %39 = sbr.rel (0) target = $region17
    $region16: #{tpu_custom_call.1} parent=1 // pred_region
      %41 = dma.done [#allocation6], 12288
    $region17: #{tpu_custom_call.1} parent=1 // pred_fallthru
      _
    %v42 = vld [vmem:[#allocation2] sm:$0xff]
    %v43 = vld [vmem:[#allocation2 + $0x8] sm:$0xf]
    %46 = vst [vmem:[#allocation1] ss:$4 sm:$0xff] %v42
    %s47 = scalar_lea.vmem [#allocation1], 32
    %48 = vst [vmem:[%s47] ss:$4 sm:$0xff] %v43
    %v49 = vld.sshfl [vmem:[#allocation1] sm:$0xff pattern:$0x73625140]
    %v50 = vld.sshfl [vmem:[#allocation1 + $0x8] sm:$0xff pattern:$0x73625140]
    %v51 = vld.sshfl [vmem:[#allocation1 + $0x10] sm:$0xff pattern:$0x73625140]
    %v52 = vld.sshfl [vmem:[#allocation1 + $0x18] sm:$0xff pattern:$0x73625140]
    %v53 = vld.sshfl [vmem:[#allocation1 + $0x20] sm:$0xff pattern:$0x73625140]
    %v54 = vld.sshfl [vmem:[#allocation1 + $0x28] sm:$0xff pattern:$0x73625140]
    %v61 = vpack.c.bf16 %v49, %v49
    %v62 = vpack.c.bf16 %v50, %v50
    %v63 = vpack.c.bf16 %v51, %v51
    %v64 = vpack.c.bf16 %v52, %v52
    %v65 = vpack.c.bf16 %v53, %v53
    %v66 = vpack.c.bf16 %v54, %v54
    %v67 = vld [vmem:[#allocation5] sm:$0xff]
    %v68 = vld [vmem:[#allocation5 + $0x8] sm:$0xff]
    %v69 = vld [vmem:[#allocation5 + $0x10] sm:$0xff]
    %v70 = vld [vmem:[#allocation5 + $0x18] sm:$0xff]
    %v71 = vld [vmem:[#allocation5 + $0x20] sm:$0xff]
    %v72 = vld [vmem:[#allocation5 + $0x28] sm:$0xff]
    %v73 = vld [vmem:[#allocation5 + $0x30] sm:$0xff]
    %v74 = vld [vmem:[#allocation5 + $0x38] sm:$0xff]
    %v75 = vld [vmem:[#allocation5 + $0x40] sm:$0xff]
    %v76 = vld [vmem:[#allocation5 + $0x48] sm:$0xff]
    %v77 = vld [vmem:[#allocation5 + $0x50] sm:$0xff]
    %v78 = vld [vmem:[#allocation5 + $0x58] sm:$0xff]
    %v79 = vld [vmem:[#allocation5 + $0x60] sm:$0xff]
    %v80 = vld [vmem:[#allocation5 + $0x68] sm:$0xff]
    %v81 = vld [vmem:[#allocation5 + $0x70] sm:$0xff]
    %v82 = vld [vmem:[#allocation5 + $0x78] sm:$0xff]
    %v83 = vld [vmem:[#allocation5 + $0x80] sm:$0xff]
    %v84 = vld [vmem:[#allocation5 + $0x88] sm:$0xff]
    %v85 = vld [vmem:[#allocation5 + $0x90] sm:$0xff]
    %v86 = vld [vmem:[#allocation5 + $0x98] sm:$0xff]
    %v87 = vld [vmem:[#allocation5 + $0xa0] sm:$0xff]
    %v88 = vld [vmem:[#allocation5 + $0xa8] sm:$0xff]
    %v89 = vld [vmem:[#allocation5 + $0xb0] sm:$0xff]
    %v90 = vld [vmem:[#allocation5 + $0xb8] sm:$0xff]
    %v91 = vld [vmem:[#allocation5 + $0xc0] sm:$0xff]
    %v92 = vld [vmem:[#allocation5 + $0xc8] sm:$0xff]
    %v93 = vld [vmem:[#allocation5 + $0xd0] sm:$0xff]
    %v94 = vld [vmem:[#allocation5 + $0xd8] sm:$0xff]
    %v95 = vld [vmem:[#allocation5 + $0xe0] sm:$0xff]
    %v96 = vld [vmem:[#allocation5 + $0xe8] sm:$0xff]
    %v97 = vld [vmem:[#allocation5 + $0xf0] sm:$0xff]
    %v98 = vld [vmem:[#allocation5 + $0xf8] sm:$0xff]
    %v99 = vld [vmem:[#allocation5 + $0x100] sm:$0xff]
    %v100 = vld [vmem:[#allocation5 + $0x108] sm:$0xff]
    %v101 = vld [vmem:[#allocation5 + $0x110] sm:$0xff]
    %v102 = vld [vmem:[#allocation5 + $0x118] sm:$0xff]
    %v103 = vld [vmem:[#allocation5 + $0x120] sm:$0xff]
    %v104 = vld [vmem:[#allocation5 + $0x128] sm:$0xff]
    %v105 = vld [vmem:[#allocation5 + $0x130] sm:$0xff]
    %v106 = vld [vmem:[#allocation5 + $0x138] sm:$0xff]
    %v107 = vld [vmem:[#allocation5 + $0x140] sm:$0xff]
    %v108 = vld [vmem:[#allocation5 + $0x148] sm:$0xff]
    %v109 = vld [vmem:[#allocation5 + $0x150] sm:$0xff]
    %v110 = vld [vmem:[#allocation5 + $0x158] sm:$0xff]
    %v111 = vld [vmem:[#allocation5 + $0x160] sm:$0xff]
    %v112 = vld [vmem:[#allocation5 + $0x168] sm:$0xff]
    %v113 = vld [vmem:[#allocation5 + $0x170] sm:$0xff]
    %v114 = vld [vmem:[#allocation5 + $0x178] sm:$0xff]
    %v115 = vld [vmem:[#allocation5 + $0x180] sm:$0xff]
    %v116 = vld [vmem:[#allocation5 + $0x188] sm:$0xff]
    %v117 = vld [vmem:[#allocation5 + $0x190] sm:$0xff]
    %v118 = vld [vmem:[#allocation5 + $0x198] sm:$0xff]
    %v119 = vld [vmem:[#allocation5 + $0x1a0] sm:$0xff]
    %v120 = vld [vmem:[#allocation5 + $0x1a8] sm:$0xff]
    %v121 = vld [vmem:[#allocation5 + $0x1b0] sm:$0xff]
    %v122 = vld [vmem:[#allocation5 + $0x1b8] sm:$0xff]
    %v123 = vld [vmem:[#allocation5 + $0x1c0] sm:$0xff]
    %v124 = vld [vmem:[#allocation5 + $0x1c8] sm:$0xff]
    %v125 = vld [vmem:[#allocation5 + $0x1d0] sm:$0xff]
    %v126 = vld [vmem:[#allocation5 + $0x1d8] sm:$0xff]
    %v127 = vld [vmem:[#allocation5 + $0x1e0] sm:$0xff]
    %v128 = vld [vmem:[#allocation5 + $0x1e8] sm:$0xff]
    %v129 = vld [vmem:[#allocation5 + $0x1f0] sm:$0xff]
    %v130 = vld [vmem:[#allocation5 + $0x1f8] sm:$0xff]
    %v131 = vld [vmem:[#allocation5 + $0x200] sm:$0xff]
    %v132 = vld [vmem:[#allocation5 + $0x208] sm:$0xff]
    %v133 = vld [vmem:[#allocation5 + $0x210] sm:$0xff]
    %v134 = vld [vmem:[#allocation5 + $0x218] sm:$0xff]
    %v135 = vld [vmem:[#allocation5 + $0x220] sm:$0xff]
    %v136 = vld [vmem:[#allocation5 + $0x228] sm:$0xff]
    %v137 = vld [vmem:[#allocation5 + $0x230] sm:$0xff]
    %v138 = vld [vmem:[#allocation5 + $0x238] sm:$0xff]
    %v139 = vld [vmem:[#allocation5 + $0x240] sm:$0xff]
    %v140 = vld [vmem:[#allocation5 + $0x248] sm:$0xff]
    %v141 = vld [vmem:[#allocation5 + $0x250] sm:$0xff]
    %v142 = vld [vmem:[#allocation5 + $0x258] sm:$0xff]
    %v143 = vld [vmem:[#allocation5 + $0x260] sm:$0xff]
    %v144 = vld [vmem:[#allocation5 + $0x268] sm:$0xff]
    %v145 = vld [vmem:[#allocation5 + $0x270] sm:$0xff]
    %v146 = vld [vmem:[#allocation5 + $0x278] sm:$0xff]
    %v147 = vld [vmem:[#allocation5 + $0x280] sm:$0xff]
    %v148 = vld [vmem:[#allocation5 + $0x288] sm:$0xff]
    %v149 = vld [vmem:[#allocation5 + $0x290] sm:$0xff]
    %v150 = vld [vmem:[#allocation5 + $0x298] sm:$0xff]
    %v151 = vld [vmem:[#allocation5 + $0x2a0] sm:$0xff]
    %v152 = vld [vmem:[#allocation5 + $0x2a8] sm:$0xff]
    %v153 = vld [vmem:[#allocation5 + $0x2b0] sm:$0xff]
    %v154 = vld [vmem:[#allocation5 + $0x2b8] sm:$0xff]
    %v155 = vld [vmem:[#allocation5 + $0x2c0] sm:$0xff]
    %v156 = vld [vmem:[#allocation5 + $0x2c8] sm:$0xff]
    %v157 = vld [vmem:[#allocation5 + $0x2d0] sm:$0xff]
    %v158 = vld [vmem:[#allocation5 + $0x2d8] sm:$0xff]
    %v159 = vld [vmem:[#allocation5 + $0x2e0] sm:$0xff]
    %v160 = vld [vmem:[#allocation5 + $0x2e8] sm:$0xff]
    %v161 = vld [vmem:[#allocation5 + $0x2f0] sm:$0xff]
    %v162 = vld [vmem:[#allocation5 + $0x2f8] sm:$0xff]
    %v259 = vunpack.c.l.b16 %v67
    %v260 = vunpack.c.h.b16 %v67
    %v261 = vunpack.c.l.b16 %v68
    %v262 = vunpack.c.h.b16 %v68
    %v263 = vunpack.c.l.b16 %v69
    %v264 = vunpack.c.h.b16 %v69
    %v265 = vunpack.c.l.b16 %v70
    %v266 = vunpack.c.h.b16 %v70
    %v267 = vunpack.c.l.b16 %v71
    %v268 = vunpack.c.h.b16 %v71
    %v269 = vunpack.c.l.b16 %v72
    %v270 = vunpack.c.h.b16 %v72
    %v271 = vunpack.c.l.b16 %v73
    %v272 = vunpack.c.h.b16 %v73
    %v273 = vunpack.c.l.b16 %v74
    %v274 = vunpack.c.h.b16 %v74
    %v275 = vunpack.c.l.b16 %v75
    %v276 = vunpack.c.h.b16 %v75
    %v277 = vunpack.c.l.b16 %v76
    %v278 = vunpack.c.h.b16 %v76
    %v279 = vunpack.c.l.b16 %v77
    %v280 = vunpack.c.h.b16 %v77
    %v281 = vunpack.c.l.b16 %v78
    %v282 = vunpack.c.h.b16 %v78
    %v283 = vunpack.c.l.b16 %v79
    %v284 = vunpack.c.h.b16 %v79
    %v285 = vunpack.c.l.b16 %v80
    %v286 = vunpack.c.h.b16 %v80
    %v287 = vunpack.c.l.b16 %v81
    %v288 = vunpack.c.h.b16 %v81
    %v289 = vunpack.c.l.b16 %v82
    %v290 = vunpack.c.h.b16 %v82
    %v291 = vunpack.c.l.b16 %v83
    %v292 = vunpack.c.h.b16 %v83
    %v293 = vunpack.c.l.b16 %v84
    %v294 = vunpack.c.h.b16 %v84
    %v295 = vunpack.c.l.b16 %v85
    %v296 = vunpack.c.h.b16 %v85
    %v297 = vunpack.c.l.b16 %v86
    %v298 = vunpack.c.h.b16 %v86
    %v299 = vunpack.c.l.b16 %v87
    %v300 = vunpack.c.h.b16 %v87
    %v301 = vunpack.c.l.b16 %v88
    %v302 = vunpack.c.h.b16 %v88
    %v303 = vunpack.c.l.b16 %v89
    %v304 = vunpack.c.h.b16 %v89
    %v305 = vunpack.c.l.b16 %v90
    %v306 = vunpack.c.h.b16 %v90
    %v307 = vunpack.c.l.b16 %v91
    %v308 = vunpack.c.h.b16 %v91
    %v309 = vunpack.c.l.b16 %v92
    %v310 = vunpack.c.h.b16 %v92
    %v311 = vunpack.c.l.b16 %v93
    %v312 = vunpack.c.h.b16 %v93
    %v313 = vunpack.c.l.b16 %v94
    %v314 = vunpack.c.h.b16 %v94
    %v315 = vunpack.c.l.b16 %v95
    %v316 = vunpack.c.h.b16 %v95
    %v317 = vunpack.c.l.b16 %v96
    %v318 = vunpack.c.h.b16 %v96
    %v319 = vunpack.c.l.b16 %v97
    %v320 = vunpack.c.h.b16 %v97
    %v321 = vunpack.c.l.b16 %v98
    %v322 = vunpack.c.h.b16 %v98
    %v323 = vunpack.c.l.b16 %v99
    %v324 = vunpack.c.h.b16 %v99
    %v325 = vunpack.c.l.b16 %v100
    %v326 = vunpack.c.h.b16 %v100
    %v327 = vunpack.c.l.b16 %v101
    %v328 = vunpack.c.h.b16 %v101
    %v329 = vunpack.c.l.b16 %v102
    %v330 = vunpack.c.h.b16 %v102
    %v331 = vunpack.c.l.b16 %v103
    %v332 = vunpack.c.h.b16 %v103
    %v333 = vunpack.c.l.b16 %v104
    %v334 = vunpack.c.h.b16 %v104
    %v335 = vunpack.c.l.b16 %v105
    %v336 = vunpack.c.h.b16 %v105
    %v337 = vunpack.c.l.b16 %v106
    %v338 = vunpack.c.h.b16 %v106
    %v339 = vunpack.c.l.b16 %v107
    %v340 = vunpack.c.h.b16 %v107
    %v341 = vunpack.c.l.b16 %v108
    %v342 = vunpack.c.h.b16 %v108
    %v343 = vunpack.c.l.b16 %v109
    %v344 = vunpack.c.h.b16 %v109
    %v345 = vunpack.c.l.b16 %v110
    %v346 = vunpack.c.h.b16 %v110
    %v347 = vunpack.c.l.b16 %v111
    %v348 = vunpack.c.h.b16 %v111
    %v349 = vunpack.c.l.b16 %v112
    %v350 = vunpack.c.h.b16 %v112
    %v351 = vunpack.c.l.b16 %v113
    %v352 = vunpack.c.h.b16 %v113
    %v353 = vunpack.c.l.b16 %v114
    %v354 = vunpack.c.h.b16 %v114
    %v355 = vunpack.c.l.b16 %v115
    %v356 = vunpack.c.h.b16 %v115
    %v357 = vunpack.c.l.b16 %v116
    %v358 = vunpack.c.h.b16 %v116
    %v359 = vunpack.c.l.b16 %v117
    %v360 = vunpack.c.h.b16 %v117
    %v361 = vunpack.c.l.b16 %v118
    %v362 = vunpack.c.h.b16 %v118
    %v363 = vunpack.c.l.b16 %v119
    %v364 = vunpack.c.h.b16 %v119
    %v365 = vunpack.c.l.b16 %v120
    %v366 = vunpack.c.h.b16 %v120
    %v367 = vunpack.c.l.b16 %v121
    %v368 = vunpack.c.h.b16 %v121
    %v369 = vunpack.c.l.b16 %v122
    %v370 = vunpack.c.h.b16 %v122
    %v371 = vunpack.c.l.b16 %v123
    %v372 = vunpack.c.h.b16 %v123
    %v373 = vunpack.c.l.b16 %v124
    %v374 = vunpack.c.h.b16 %v124
    %v375 = vunpack.c.l.b16 %v125
    %v376 = vunpack.c.h.b16 %v125
    %v377 = vunpack.c.l.b16 %v126
    %v378 = vunpack.c.h.b16 %v126
    %v379 = vunpack.c.l.b16 %v127
    %v380 = vunpack.c.h.b16 %v127
    %v381 = vunpack.c.l.b16 %v128
    %v382 = vunpack.c.h.b16 %v128
    %v383 = vunpack.c.l.b16 %v129
    %v384 = vunpack.c.h.b16 %v129
    %v385 = vunpack.c.l.b16 %v130
    %v386 = vunpack.c.h.b16 %v130
    %v387 = vunpack.c.l.b16 %v131
    %v388 = vunpack.c.h.b16 %v131
    %v389 = vunpack.c.l.b16 %v132
    %v390 = vunpack.c.h.b16 %v132
    %v391 = vunpack.c.l.b16 %v133
    %v392 = vunpack.c.h.b16 %v133
    %v393 = vunpack.c.l.b16 %v134
    %v394 = vunpack.c.h.b16 %v134
    %v395 = vunpack.c.l.b16 %v135
    %v396 = vunpack.c.h.b16 %v135
    %v397 = vunpack.c.l.b16 %v136
    %v398 = vunpack.c.h.b16 %v136
    %v399 = vunpack.c.l.b16 %v137
    %v400 = vunpack.c.h.b16 %v137
    %v401 = vunpack.c.l.b16 %v138
    %v402 = vunpack.c.h.b16 %v138
    %v403 = vunpack.c.l.b16 %v139
    %v404 = vunpack.c.h.b16 %v139
    %v405 = vunpack.c.l.b16 %v140
    %v406 = vunpack.c.h.b16 %v140
    %v407 = vunpack.c.l.b16 %v141
    %v408 = vunpack.c.h.b16 %v141
    %v409 = vunpack.c.l.b16 %v142
    %v410 = vunpack.c.h.b16 %v142
    %v411 = vunpack.c.l.b16 %v143
    %v412 = vunpack.c.h.b16 %v143
    %v413 = vunpack.c.l.b16 %v144
    %v414 = vunpack.c.h.b16 %v144
    %v415 = vunpack.c.l.b16 %v145
    %v416 = vunpack.c.h.b16 %v145
    %v417 = vunpack.c.l.b16 %v146
    %v418 = vunpack.c.h.b16 %v146
    %v419 = vunpack.c.l.b16 %v147
    %v420 = vunpack.c.h.b16 %v147
    %v421 = vunpack.c.l.b16 %v148
    %v422 = vunpack.c.h.b16 %v148
    %v423 = vunpack.c.l.b16 %v149
    %v424 = vunpack.c.h.b16 %v149
    %v425 = vunpack.c.l.b16 %v150
    %v426 = vunpack.c.h.b16 %v150
    %v427 = vunpack.c.l.b16 %v151
    %v428 = vunpack.c.h.b16 %v151
    %v429 = vunpack.c.l.b16 %v152
    %v430 = vunpack.c.h.b16 %v152
    %v431 = vunpack.c.l.b16 %v153
    %v432 = vunpack.c.h.b16 %v153
    %v433 = vunpack.c.l.b16 %v154
    %v434 = vunpack.c.h.b16 %v154
    %v435 = vunpack.c.l.b16 %v155
    %v436 = vunpack.c.h.b16 %v155
    %v437 = vunpack.c.l.b16 %v156
    %v438 = vunpack.c.h.b16 %v156
    %v439 = vunpack.c.l.b16 %v157
    %v440 = vunpack.c.h.b16 %v157
    %v441 = vunpack.c.l.b16 %v158
    %v442 = vunpack.c.h.b16 %v158
    %v443 = vunpack.c.l.b16 %v159
    %v444 = vunpack.c.h.b16 %v159
    %v445 = vunpack.c.l.b16 %v160
    %v446 = vunpack.c.h.b16 %v160
    %v447 = vunpack.c.l.b16 %v161
    %v448 = vunpack.c.h.b16 %v161
    %v449 = vunpack.c.l.b16 %v162
    %v450 = vunpack.c.h.b16 %v162
    %v451 = vpack.c.b16 %v261, %v259
    %v452 = vpack.c.b16 %v262, %v260
    %v453 = vpack.c.b16 %v265, %v263
    %v454 = vpack.c.b16 %v266, %v264
    %v455 = vpack.c.b16 %v269, %v267
    %v456 = vpack.c.b16 %v270, %v268
    %v457 = vpack.c.b16 %v273, %v271
    %v458 = vpack.c.b16 %v274, %v272
    %v459 = vpack.c.b16 %v277, %v275
    %v460 = vpack.c.b16 %v278, %v276
    %v461 = vpack.c.b16 %v281, %v279
    %v462 = vpack.c.b16 %v282, %v280
    %v463 = vpack.c.b16 %v285, %v283
    %v464 = vpack.c.b16 %v286, %v284
    %v465 = vpack.c.b16 %v289, %v287
    %v466 = vpack.c.b16 %v290, %v288
    %v467 = vpack.c.b16 %v293, %v291
    %v468 = vpack.c.b16 %v294, %v292
    %v469 = vpack.c.b16 %v297, %v295
    %v470 = vpack.c.b16 %v298, %v296
    %v471 = vpack.c.b16 %v301, %v299
    %v472 = vpack.c.b16 %v302, %v300
    %v473 = vpack.c.b16 %v305, %v303
    %v474 = vpack.c.b16 %v306, %v304
    %v475 = vpack.c.b16 %v309, %v307
    %v476 = vpack.c.b16 %v310, %v308
    %v477 = vpack.c.b16 %v313, %v311
    %v478 = vpack.c.b16 %v314, %v312
    %v479 = vpack.c.b16 %v317, %v315
    %v480 = vpack.c.b16 %v318, %v316
    %v481 = vpack.c.b16 %v321, %v319
    %v482 = vpack.c.b16 %v322, %v320
    %v483 = vpack.c.b16 %v325, %v323
    %v484 = vpack.c.b16 %v326, %v324
    %v485 = vpack.c.b16 %v329, %v327
    %v486 = vpack.c.b16 %v330, %v328
    %v487 = vpack.c.b16 %v333, %v331
    %v488 = vpack.c.b16 %v334, %v332
    %v489 = vpack.c.b16 %v337, %v335
    %v490 = vpack.c.b16 %v338, %v336
    %v491 = vpack.c.b16 %v341, %v339
    %v492 = vpack.c.b16 %v342, %v340
    %v493 = vpack.c.b16 %v345, %v343
    %v494 = vpack.c.b16 %v346, %v344
    %v495 = vpack.c.b16 %v349, %v347
    %v496 = vpack.c.b16 %v350, %v348
    %v497 = vpack.c.b16 %v353, %v351
    %v498 = vpack.c.b16 %v354, %v352
    %v499 = vpack.c.b16 %v357, %v355
    %v500 = vpack.c.b16 %v358, %v356
    %v501 = vpack.c.b16 %v361, %v359
    %v502 = vpack.c.b16 %v362, %v360
    %v503 = vpack.c.b16 %v365, %v363
    %v504 = vpack.c.b16 %v366, %v364
    %v505 = vpack.c.b16 %v369, %v367
    %v506 = vpack.c.b16 %v370, %v368
    %v507 = vpack.c.b16 %v373, %v371
    %v508 = vpack.c.b16 %v374, %v372
    %v509 = vpack.c.b16 %v377, %v375
    %v510 = vpack.c.b16 %v378, %v376
    %v511 = vpack.c.b16 %v381, %v379
    %v512 = vpack.c.b16 %v382, %v380
    %v513 = vpack.c.b16 %v385, %v383
    %v514 = vpack.c.b16 %v386, %v384
    %v515 = vpack.c.b16 %v389, %v387
    %v516 = vpack.c.b16 %v390, %v388
    %v517 = vpack.c.b16 %v393, %v391
    %v518 = vpack.c.b16 %v394, %v392
    %v519 = vpack.c.b16 %v397, %v395
    %v520 = vpack.c.b16 %v398, %v396
    %v521 = vpack.c.b16 %v401, %v399
    %v522 = vpack.c.b16 %v402, %v400
    %v523 = vpack.c.b16 %v405, %v403
    %v524 = vpack.c.b16 %v406, %v404
    %v525 = vpack.c.b16 %v409, %v407
    %v526 = vpack.c.b16 %v410, %v408
    %v527 = vpack.c.b16 %v413, %v411
    %v528 = vpack.c.b16 %v414, %v412
    %v529 = vpack.c.b16 %v417, %v415
    %v530 = vpack.c.b16 %v418, %v416
    %v531 = vpack.c.b16 %v421, %v419
    %v532 = vpack.c.b16 %v422, %v420
    %v533 = vpack.c.b16 %v425, %v423
    %v534 = vpack.c.b16 %v426, %v424
    %v535 = vpack.c.b16 %v429, %v427
    %v536 = vpack.c.b16 %v430, %v428
    %v537 = vpack.c.b16 %v433, %v431
    %v538 = vpack.c.b16 %v434, %v432
    %v539 = vpack.c.b16 %v437, %v435
    %v540 = vpack.c.b16 %v438, %v436
    %v541 = vpack.c.b16 %v441, %v439
    %v542 = vpack.c.b16 %v442, %v440
    %v543 = vpack.c.b16 %v445, %v443
    %v544 = vpack.c.b16 %v446, %v444
    %v545 = vpack.c.b16 %v449, %v447
    %v546 = vpack.c.b16 %v450, %v448
    %643 = vmatpush.bf16.msra.mxu0 %v465
    %644 = vmatpush.bf16.msra.mxu0 %v463
    %645 = vmatpush.bf16.msra.mxu0 %v461
    %646 = vmatpush.bf16.msra.mxu0 %v459
    %647 = vmatpush.bf16.msra.mxu0 %v457
    %648 = vmatpush.bf16.msra.mxu0 %v455
    %649 = vmatpush.bf16.msra.mxu0 %v453
    %650 = vmatpush.bf16.msra.mxu0 %v451
    %651 = vmatmul.bf16.gmra.mxu0 %v61
    %v652 = vpop.f32.mrf.mxu0
    %v653 = vadd.f32 0.0, %v652
    %v654 = vpop.f32.mrf.mxu0
    %655 = vdwg.mxu0
    %656 = vmatpush.bf16.msra.mxu0 %v481
    %657 = vmatpush.bf16.msra.mxu0 %v479
    %658 = vmatpush.bf16.msra.mxu0 %v477
    %659 = vmatpush.bf16.msra.mxu0 %v475
    %660 = vmatpush.bf16.msra.mxu0 %v473
    %661 = vmatpush.bf16.msra.mxu0 %v471
    %662 = vmatpush.bf16.msra.mxu0 %v469
    %663 = vmatpush.bf16.msra.mxu0 %v467
    %664 = vmatmul.bf16.gmra.mxu0 %v62
    %v665 = vpop.f32.mrf.mxu0
    %v666 = vadd.f32 %v653, %v665
    %v667 = vpop.f32.mrf.mxu0
    %668 = vdwg.mxu0
    %669 = vmatpush.bf16.msra.mxu0 %v497
    %670 = vmatpush.bf16.msra.mxu0 %v495
    %671 = vmatpush.bf16.msra.mxu0 %v493
    %672 = vmatpush.bf16.msra.mxu0 %v491
    %673 = vmatpush.bf16.msra.mxu0 %v489
    %674 = vmatpush.bf16.msra.mxu0 %v487
    %675 = vmatpush.bf16.msra.mxu0 %v485
    %676 = vmatpush.bf16.msra.mxu0 %v483
    %677 = vmatmul.bf16.gmra.mxu0 %v63
    %v678 = vpop.f32.mrf.mxu0
    %v679 = vadd.f32 %v666, %v678
    %v680 = vpop.f32.mrf.mxu0
    %681 = vdwg.mxu0
    %682 = vmatpush.bf16.msra.mxu0 %v513
    %683 = vmatpush.bf16.msra.mxu0 %v511
    %684 = vmatpush.bf16.msra.mxu0 %v509
    %685 = vmatpush.bf16.msra.mxu0 %v507
    %686 = vmatpush.bf16.msra.mxu0 %v505
    %687 = vmatpush.bf16.msra.mxu0 %v503
    %688 = vmatpush.bf16.msra.mxu0 %v501
    %689 = vmatpush.bf16.msra.mxu0 %v499
    %690 = vmatmul.bf16.gmra.mxu0 %v64
    %v691 = vpop.f32.mrf.mxu0
    %v692 = vadd.f32 %v679, %v691
    %v693 = vpop.f32.mrf.mxu0
    %694 = vdwg.mxu0
    %695 = vmatpush.bf16.msra.mxu0 %v529
    %696 = vmatpush.bf16.msra.mxu0 %v527
    %697 = vmatpush.bf16.msra.mxu0 %v525
    %698 = vmatpush.bf16.msra.mxu0 %v523
    %699 = vmatpush.bf16.msra.mxu0 %v521
    %700 = vmatpush.bf16.msra.mxu0 %v519
    %701 = vmatpush.bf16.msra.mxu0 %v517
    %702 = vmatpush.bf16.msra.mxu0 %v515
    %703 = vmatmul.bf16.gmra.mxu0 %v65
    %v704 = vpop.f32.mrf.mxu0
    %v705 = vadd.f32 %v692, %v704
    %v706 = vpop.f32.mrf.mxu0
    %707 = vdwg.mxu0
    %708 = vmatpush.bf16.msra.mxu0 %v545
    %709 = vmatpush.bf16.msra.mxu0 %v543
    %710 = vmatpush.bf16.msra.mxu0 %v541
    %711 = vmatpush.bf16.msra.mxu0 %v539
    %712 = vmatpush.bf16.msra.mxu0 %v537
    %713 = vmatpush.bf16.msra.mxu0 %v535
    %714 = vmatpush.bf16.msra.mxu0 %v533
    %715 = vmatpush.bf16.msra.mxu0 %v531
    %716 = vmatmul.bf16.gmra.mxu0 %v66
    %v717 = vpop.f32.mrf.mxu0
    %v718 = vadd.f32 %v705, %v717
    %v719 = vpop.f32.mrf.mxu0
    %720 = vdwg.mxu0
    %721 = vmatpush.bf16.msra.mxu0 %v466
    %722 = vmatpush.bf16.msra.mxu0 %v464
    %723 = vmatpush.bf16.msra.mxu0 %v462
    %724 = vmatpush.bf16.msra.mxu0 %v460
    %725 = vmatpush.bf16.msra.mxu0 %v458
    %726 = vmatpush.bf16.msra.mxu0 %v456
    %727 = vmatpush.bf16.msra.mxu0 %v454
    %728 = vmatpush.bf16.msra.mxu0 %v452
    %729 = vmatmul.bf16.gmra.mxu0 %v61
    %v730 = vpop.f32.mrf.mxu0
    %v731 = vadd.f32 0.0, %v730
    %v732 = vpop.f32.mrf.mxu0
    %733 = vdwg.mxu0
    %734 = vmatpush.bf16.msra.mxu0 %v482
    %735 = vmatpush.bf16.msra.mxu0 %v480
    %736 = vmatpush.bf16.msra.mxu0 %v478
    %737 = vmatpush.bf16.msra.mxu0 %v476
    %738 = vmatpush.bf16.msra.mxu0 %v474
    %739 = vmatpush.bf16.msra.mxu0 %v472
    %740 = vmatpush.bf16.msra.mxu0 %v470
    %741 = vmatpush.bf16.msra.mxu0 %v468
    %742 = vmatmul.bf16.gmra.mxu0 %v62
    %v743 = vpop.f32.mrf.mxu0
    %v744 = vadd.f32 %v731, %v743
    %v745 = vpop.f32.mrf.mxu0
    %746 = vdwg.mxu0
    %747 = vmatpush.bf16.msra.mxu0 %v498
    %748 = vmatpush.bf16.msra.mxu0 %v496
    %749 = vmatpush.bf16.msra.mxu0 %v494
    %750 = vmatpush.bf16.msra.mxu0 %v492
    %751 = vmatpush.bf16.msra.mxu0 %v490
    %752 = vmatpush.bf16.msra.mxu0 %v488
    %753 = vmatpush.bf16.msra.mxu0 %v486
    %754 = vmatpush.bf16.msra.mxu0 %v484
    %755 = vmatmul.bf16.gmra.mxu0 %v63
    %v756 = vpop.f32.mrf.mxu0
    %v757 = vadd.f32 %v744, %v756
    %v758 = vpop.f32.mrf.mxu0
    %759 = vdwg.mxu0
    %760 = vmatpush.bf16.msra.mxu0 %v514
    %761 = vmatpush.bf16.msra.mxu0 %v512
    %762 = vmatpush.bf16.msra.mxu0 %v510
    %763 = vmatpush.bf16.msra.mxu0 %v508
    %764 = vmatpush.bf16.msra.mxu0 %v506
    %765 = vmatpush.bf16.msra.mxu0 %v504
    %766 = vmatpush.bf16.msra.mxu0 %v502
    %767 = vmatpush.bf16.msra.mxu0 %v500
    %768 = vmatmul.bf16.gmra.mxu0 %v64
    %v769 = vpop.f32.mrf.mxu0
    %v770 = vadd.f32 %v757, %v769
    %v771 = vpop.f32.mrf.mxu0
    %772 = vdwg.mxu0
    %773 = vmatpush.bf16.msra.mxu0 %v530
    %774 = vmatpush.bf16.msra.mxu0 %v528
    %775 = vmatpush.bf16.msra.mxu0 %v526
    %776 = vmatpush.bf16.msra.mxu0 %v524
    %777 = vmatpush.bf16.msra.mxu0 %v522
    %778 = vmatpush.bf16.msra.mxu0 %v520
    %779 = vmatpush.bf16.msra.mxu0 %v518
    %780 = vmatpush.bf16.msra.mxu0 %v516
    %781 = vmatmul.bf16.gmra.mxu0 %v65
    %v782 = vpop.f32.mrf.mxu0
    %v783 = vadd.f32 %v770, %v782
    %v784 = vpop.f32.mrf.mxu0
    %785 = vdwg.mxu0
    %786 = vmatpush.bf16.msra.mxu0 %v546
    %787 = vmatpush.bf16.msra.mxu0 %v544
    %788 = vmatpush.bf16.msra.mxu0 %v542
    %789 = vmatpush.bf16.msra.mxu0 %v540
    %790 = vmatpush.bf16.msra.mxu0 %v538
    %791 = vmatpush.bf16.msra.mxu0 %v536
    %792 = vmatpush.bf16.msra.mxu0 %v534
    %793 = vmatpush.bf16.msra.mxu0 %v532
    %794 = vmatmul.bf16.gmra.mxu0 %v66
    %v795 = vpop.f32.mrf.mxu0
    %v796 = vadd.f32 %v783, %v795
    %v797 = vpop.f32.mrf.mxu0
    %798 = vdwg.mxu0
    %v801 = vrot.slane %v796, 6
    %vm802 = vcmask 1041408
    %v803 = vsel %vm802, %v718, %v801
    %805 = vst [vmem:[#allocation7] sm:$0xf] %v803
    // Predicated region
    $region18: #{tpu_custom_call.1} parent=1 // pred_check
      _
    $region19: #{tpu_custom_call.1} parent=1 // pred_check_branch
      %807 = sbr.rel (0) target = $region21
    $region20: #{tpu_custom_call.1} parent=1 // pred_region
      %809 = vsyncadd [#allocation4], 0
      %s811 = sshll.u32 [#allocation7], 4
      %s812 = int_to_ptr.vmem [resolvable:$true] %s811
      %s813 = sshll.u32 %s2, 4
      %s814 = int_to_ptr.hbm [resolvable:$true] %s813
      %816 = dma.vmem_to_hbm [thread:$0]  %s812, 64, %s814, [#allocation4]
    $region21: #{tpu_custom_call.1} parent=1 // pred_fallthru
      _
    // Predicated region
    $region22: #{tpu_custom_call.1} parent=1 // pred_check
      _
    $region23: #{tpu_custom_call.1} parent=1 // pred_check_branch
      %818 = sbr.rel (0) target = $region25
    $region24: #{tpu_custom_call.1} parent=1 // pred_region
      %820 = dma.done [#allocation4], 64
    $region25: #{tpu_custom_call.1} parent=1 // pred_fallthru
      _
    %821 = vsyncpa [#allocation3], 1
    %822 = vsyncpa [#allocation6], 1
    %823 = vsyncpa [#allocation4], 1

</llo_original>
